<compile_context>
chip_gen: v6e
topology: v6e:2x2x1
jax: 0.10.0
libtpu: 0.0.40
codegen_flags: <defaults>
</compile_context>

<pallas_src>
import numpy as np

import jax
import jax.numpy as jnp
from jax.experimental import pallas as pl
from jax.experimental.pallas import tpu as pltpu

BN_EPS = 1e-5


# ------------------------------------------------------------------ kernel ----
def _combine_ky(t, wc_out):
    """Combine the three kernel-row (ky) contributions of a banded 3x3 'same' conv.

    t: (H, 3*wc_out) f32 where columns [ky*wc_out:(ky+1)*wc_out] hold  x_rows @ Band[ky].
    out[h] = t0[h-1] + t1[h] + t2[h+1]  (rows outside [0, H) are zero = H padding),
    i.e. the H-shift is applied to the matmul *result* with aligned reads -- no pad
    scratch, no unaligned sublane window loads.
    """
    H = t.shape[0]
    t0 = t[:, 0 * wc_out:1 * wc_out]
    t1 = t[:, 1 * wc_out:2 * wc_out]
    t2 = t[:, 2 * wc_out:3 * wc_out]
    z = jnp.zeros((1, wc_out), t.dtype)
    t0s = jnp.concatenate([z, t0[:H - 1, :]], axis=0)   # row h <- t0[h-1]
    t2s = jnp.concatenate([t2[1:, :], z], axis=0)       # row h <- t2[h+1]
    return t0s + t1 + t2s


def _make_resblock_kernel(has_downsample, H, wc_in, wc_out):
    three = 3 * wc_out

    def kernel(x_ref, wx_ref, b1_ref, w2_ref, b2_ref, *rest):
        if has_downsample:
            bd_ref, o_ref = rest
        else:
            (o_ref,) = rest

        x = x_ref[...].reshape(H, wc_in)                 # (H, W*C_in) f32 activations
        xb = x.astype(jnp.bfloat16)                      # bf16 MXU operand

        # ONE MXU issue for conv1 (and, if present, the downsample conv): ky bands
        # (and downsample bands) are concatenated along N host-side; BN scale folded.
        y = jnp.dot(xb, wx_ref[...], preferred_element_type=jnp.float32)

        # main path: conv1 + bn1 (folded) -> relu
        h1 = _combine_ky(y[:, :three], wc_out) + b1_ref[...]
        h1 = jnp.maximum(h1, 0.0)

        # conv2 + bn2 (folded): one MXU issue, N = 3*wc_out
        y2 = jnp.dot(h1.astype(jnp.bfloat16), w2_ref[...],
                     preferred_element_type=jnp.float32)
        h2 = _combine_ky(y2, wc_out) + b2_ref[...]

        # residual path: Identity, or conv3x3 + BN (shares the x-matmul above)
        if has_downsample:
            res = _combine_ky(y[:, three:2 * three], wc_out) + bd_ref[...]
        else:
            res = x                                      # requires C_in == C_out

        o_ref[...] = jnp.maximum(res + h2, 0.0).reshape(1, H, wc_out)

    return kernel


# --------------------------------------------------- host-side weight prep ----
def _conv_bn_to_banded(w_oihw, gamma, beta, mean, var, W):
    """(C_out, C_in, 3, 3) conv weight + eval-mode BN -> banded matrix + bias row.

    Returns:
      band_n : (W*C_in, 3*W*C_out) f32 -- Band[ky] blocks concatenated along N,
               with the per-output-channel BN scale folded into the weights.
      bias   : (1, W*C_out) f32 -- folded BN bias, lane-tiled.
    """
    w = np.asarray(w_oihw, np.float32)
    c_out, c_in = w.shape[0], w.shape[1]
    scale = np.asarray(gamma, np.float32) / np.sqrt(np.asarray(var, np.float32) + BN_EPS)
    bias = np.asarray(beta, np.float32) - np.asarray(mean, np.float32) * scale
    wc_in, wc_out = W * c_in, W * c_out

    band = np.zeros((3, wc_in, wc_out), np.float32)
    for ky in range(3):
        for kx in range(3):
            blk = (w[:, :, ky, kx] * scale[:, None]).T          # (C_in, C_out), BN-scaled
            for xo in range(W):
                xi = xo + kx - 1                                 # padding = 1 along W
                if 0 <= xi < W:
                    band[ky,
                         xi * c_in:(xi + 1) * c_in,
                         xo * c_out:(xo + 1) * c_out] = blk
    band_n = np.concatenate([band[0], band[1], band[2]], axis=1)  # (wc_in, 3*wc_out)
    bias_row = np.tile(bias, W).reshape(1, wc_out)
    return band_n, bias_row


def prepare_kernel_params(p, W, has_downsample):
    w1, b1 = _conv_bn_to_banded(p["w1"], p["g1"], p["be1"], p["m1"], p["v1"], W)
    w2, b2 = _conv_bn_to_banded(p["w2"], p["g2"], p["be2"], p["m2"], p["v2"], W)
    if has_downsample:
        wd, bd = _conv_bn_to_banded(p["wd"], p["gd"], p["bed"], p["md"], p["vd"], W)
        wx = np.concatenate([w1, wd], axis=1)    # conv1 + downsample share one matmul
    else:
        wx = w1
    kp = {"wx": jnp.asarray(wx).astype(jnp.bfloat16),   # bf16 MXU weights
          "w2": jnp.asarray(w2).astype(jnp.bfloat16),
          "b1": jnp.asarray(b1), "b2": jnp.asarray(b2)}
    if has_downsample:
        kp["bd"] = jnp.asarray(bd)
    return kp


# ---------------------------------------------------------------- wrappers ----
def resblock_forward_packed(x_packed, kp, has_downsample):
    """Fused ResBlock on the lane-packed layout: (B, H, W*C_in) f32 -> (B, H, W*C_out) f32.

    Keep this layout between blocks in a multi-block network to avoid per-block
    NCHW transposes.
    """
    B, H, wc_in = x_packed.shape
    wc_out = kp["w2"].shape[0]
    if not has_downsample and wc_in != wc_out:
        raise ValueError("Identity residual requires in_channels == out_channels")

    inputs = [x_packed, kp["wx"], kp["b1"], kp["w2"], kp["b2"]]
    if has_downsample:
        inputs.append(kp["bd"])

    def full_spec(a):
        return pl.BlockSpec(a.shape, lambda b, _n=a.ndim: (0,) * _n)

    in_specs = ([pl.BlockSpec((1, H, wc_in), lambda b: (b, 0, 0))]
                + [full_spec(a) for a in inputs[1:]])

    return pl.pallas_call(
        _make_resblock_kernel(has_downsample, H, wc_in, wc_out),
        out_shape=jax.ShapeDtypeStruct((B, H, wc_out), jnp.float32),
        grid=(B,),
        in_specs=in_specs,
        out_specs=pl.BlockSpec((1, H, wc_out), lambda b: (b, 0, 0)),
        compiler_params=pltpu.CompilerParams(dimension_semantics=("parallel",)),
    )(*inputs)


def resblock_forward(x_nchw, kp, has_downsample):
    """NCHW convenience wrapper (layout glue only)."""
    B, C_in, H, W = x_nchw.shape
    wc_out = kp["w2"].shape[0]
    C_out = wc_out // W
    x = jnp.transpose(x_nchw, (0, 2, 3, 1)).reshape(B, H, W * C_in)
    out = resblock_forward_packed(x, kp, has_downsample)
    return out.reshape(B, H, W, C_out).transpose(0, 3, 1, 2)


# -------------------------------------------------------- reference / init ----
def resblock_reference(x, p, has_downsample):
    def conv(a, w):
        return jax.lax.conv_general_dilated(
            a, w, (1, 1), ((1, 1), (1, 1)),
            dimension_numbers=("NCHW", "OIHW", "NCHW"),
            precision=jax.lax.Precision.HIGHEST)

    def bn(a, g, b, m, v):
        s = g / jnp.sqrt(v + BN_EPS)
        return a * s[None, :, None, None] + (b - m * s)[None, :, None, None]

    out = jax.nn.relu(bn(conv(x, p["w1"]), p["g1"], p["be1"], p["m1"], p["v1"]))
    out = bn(conv(out, p["w2"]), p["g2"], p["be2"], p["m2"], p["v2"])
    if has_downsample:
        res = bn(conv(x, p["wd"]), p["gd"], p["bed"], p["md"], p["vd"])
    else:
        res = x
    return jax.nn.relu(res + out)


def init_resblock_params(key, c_in, c_out, has_downsample):
    ks = jax.random.split(key, 6)

    def conv_w(k, co, ci):
        fan = 1.0 / np.sqrt(9.0 * ci)
        return (fan * jax.random.normal(k, (co, ci, 3, 3))).astype(jnp.float32)

    def bn_p(k, c):
        k1, k2, k3, k4 = jax.random.split(k, 4)
        return ((1.0 + 0.1 * jax.random.normal(k1, (c,))).astype(jnp.float32),   # gamma
                (0.1 * jax.random.normal(k2, (c,))).astype(jnp.float32),          # beta
                (0.1 * jax.random.normal(k3, (c,))).astype(jnp.float32),          # running mean
                (1.0 + 0.5 * jax.random.uniform(k4, (c,))).astype(jnp.float32))   # running var

    p = {}
    p["w1"] = conv_w(ks[0], c_out, c_in)
    p["g1"], p["be1"], p["m1"], p["v1"] = bn_p(ks[1], c_out)
    p["w2"] = conv_w(ks[2], c_out, c_out)
    p["g2"], p["be2"], p["m2"], p["v2"] = bn_p(ks[3], c_out)
    if has_downsample:
        p["wd"] = conv_w(ks[4], c_out, c_in)
        p["gd"], p["bed"], p["md"], p["vd"] = bn_p(ks[5], c_out)
    return p


# ------------------------------------------------------------------- main ----
if __name__ == "__main__":
    key = jax.random.PRNGKey(0)
    k1, k2, k3, k4 = jax.random.split(key, 4)

    # Case 1: module default -- ResBlock(8, 8), downsample=None (Identity residual).
    B, C, H, W = 2, 8, 16, 16
    x1 = jax.random.normal(k1, (B, C, H, W), dtype=jnp.float32)
    p1 = init_resblock_params(k2, C, C, has_downsample=False)
    kp1 = prepare_kernel_params(p1, W, has_downsample=False)
    y1 = jax.block_until_ready(resblock_forward(x1, kp1, has_downsample=False))
    assert y1.shape == (B, C, H, W)
    r1 = resblock_reference(x1, p1, False)
    assert float(jnp.max(jnp.abs(y1 - r1))) < 5e-2   # loose only because of bf16 MXU weights

    # Case 2: channel-changing block -- ResBlock(4, 8) with downsample = conv3x3 + BN.
    C_in, C_out = 4, 8
    x2 = jax.random.normal(k3, (B, C_in, H, W), dtype=jnp.float32)
    p2 = init_resblock_params(k4, C_in, C_out, has_downsample=True)
    kp2 = prepare_kernel_params(p2, W, has_downsample=True)
    y2 = jax.block_until_ready(resblock_forward(x2, kp2, has_downsample=True))
    assert y2.shape == (B, C_out, H, W)
    r2 = resblock_reference(x2, p2, True)
    assert float(jnp.max(jnp.abs(y2 - r2))) < 5e-2

    assert bool(jnp.all(jnp.isfinite(y1))) and bool(jnp.all(jnp.isfinite(y2)))
    print("KERNEL_OK")
</pallas_src>

<mosaic_0001>
module attributes {stable_mosaic.version = 11 : i64} {
  func.func @kernel(%arg0: i32, %arg1: memref<1x16x128xf32, #tpu.memory_space<vmem>>, %arg2: memref<128x384xbf16, #tpu.memory_space<vmem>>, %arg3: memref<1x128xf32, #tpu.memory_space<vmem>>, %arg4: memref<128x384xbf16, #tpu.memory_space<vmem>>, %arg5: memref<1x128xf32, #tpu.memory_space<vmem>>, %arg6: memref<1x16x128xf32, #tpu.memory_space<vmem>>) attributes {dimension_semantics = [#tpu.dimension_semantics<parallel>], iteration_bounds = array<i64: 2>, scalar_prefetch = 0 : i64, scratch_operands = 0 : i64, tpu.core_type = #tpu.core_type<tc>, window_params = [{transform_indices = @transform_0, window_bounds = array<i64: 1, 16, 128>}, {pipeline_mode = #tpu.pipeline_mode<synchronous>, transform_indices = @transform_1, window_bounds = array<i64: 128, 384>}, {pipeline_mode = #tpu.pipeline_mode<synchronous>, transform_indices = @transform_2, window_bounds = array<i64: 1, 128>}, {pipeline_mode = #tpu.pipeline_mode<synchronous>, transform_indices = @transform_3, window_bounds = array<i64: 128, 384>}, {pipeline_mode = #tpu.pipeline_mode<synchronous>, transform_indices = @transform_4, window_bounds = array<i64: 1, 128>}, {transform_indices = @transform_5, window_bounds = array<i64: 1, 16, 128>}]} {
    %c0 = arith.constant 0 : index
    %c0_0 = arith.constant 0 : index
    %c0_1 = arith.constant 0 : index
    %0 = vector.load %arg1[%c0, %c0_0, %c0_1] : memref<1x16x128xf32, #tpu.memory_space<vmem>>, vector<1x16x128xf32>
    %1 = vector.shape_cast %0 : vector<1x16x128xf32> to vector<16x128xf32>
    %2 = arith.truncf %1 : vector<16x128xf32> to vector<16x128xbf16>
    %c0_2 = arith.constant 0 : index
    %c0_3 = arith.constant 0 : index
    %3 = vector.load %arg2[%c0_2, %c0_3] : memref<128x384xbf16, #tpu.memory_space<vmem>>, vector<128x384xbf16>
    %cst = arith.constant dense<0.000000e+00> : vector<16x384xf32>
    %4 = tpu.matmul %2, %3, %cst {dimension_numbers = #tpu.dot_dimension_numbers<[1], [0], [0], [1], [0, 0, 1, 1], [], []>} : vector<16x128xbf16>, vector<128x384xbf16>, vector<16x384xf32> -> vector<16x384xf32>
    %5 = vector.extract_strided_slice %4 {offsets = [0, 0], sizes = [16, 128], strides = [1, 1]} : vector<16x384xf32> to vector<16x128xf32>
    %6 = vector.extract_strided_slice %4 {offsets = [0, 128], sizes = [16, 128], strides = [1, 1]} : vector<16x384xf32> to vector<16x128xf32>
    %7 = vector.extract_strided_slice %4 {offsets = [0, 256], sizes = [16, 128], strides = [1, 1]} : vector<16x384xf32> to vector<16x128xf32>
    %cst_4 = arith.constant 0.000000e+00 : f32
    %8 = vector.broadcast %cst_4 : f32 to vector<1x128xf32>
    %9 = vector.extract_strided_slice %5 {offsets = [0, 0], sizes = [15, 128], strides = [1, 1]} : vector<16x128xf32> to vector<15x128xf32>
    %10 = tpu.concatenate %8, %9 in 0 : vector<1x128xf32>, vector<15x128xf32> -> vector<16x128xf32>
    %11 = vector.extract_strided_slice %7 {offsets = [1, 0], sizes = [15, 128], strides = [1, 1]} : vector<16x128xf32> to vector<15x128xf32>
    %12 = tpu.concatenate %11, %8 in 0 : vector<15x128xf32>, vector<1x128xf32> -> vector<16x128xf32>
    %13 = arith.addf %10, %6 : vector<16x128xf32>
    %14 = arith.addf %13, %12 : vector<16x128xf32>
    %c0_5 = arith.constant 0 : index
    %c0_6 = arith.constant 0 : index
    %15 = vector.load %arg3[%c0_5, %c0_6] : memref<1x128xf32, #tpu.memory_space<vmem>>, vector<1x128xf32>
    %16 = vector.broadcast %15 : vector<1x128xf32> to vector<16x128xf32>
    %17 = arith.addf %14, %16 : vector<16x128xf32>
    %cst_7 = arith.constant 0.000000e+00 : f32
    %18 = vector.broadcast %cst_7 : f32 to vector<16x128xf32>
    %19 = arith.maximumf %17, %18 : vector<16x128xf32>
    %20 = arith.truncf %19 : vector<16x128xf32> to vector<16x128xbf16>
    %c0_8 = arith.constant 0 : index
    %c0_9 = arith.constant 0 : index
    %21 = vector.load %arg4[%c0_8, %c0_9] : memref<128x384xbf16, #tpu.memory_space<vmem>>, vector<128x384xbf16>
    %cst_10 = arith.constant dense<0.000000e+00> : vector<16x384xf32>
    %22 = tpu.matmul %20, %21, %cst_10 {dimension_numbers = #tpu.dot_dimension_numbers<[1], [0], [0], [1], [0, 0, 1, 1], [], []>} : vector<16x128xbf16>, vector<128x384xbf16>, vector<16x384xf32> -> vector<16x384xf32>
    %23 = vector.extract_strided_slice %22 {offsets = [0, 0], sizes = [16, 128], strides = [1, 1]} : vector<16x384xf32> to vector<16x128xf32>
    %24 = vector.extract_strided_slice %22 {offsets = [0, 128], sizes = [16, 128], strides = [1, 1]} : vector<16x384xf32> to vector<16x128xf32>
    %25 = vector.extract_strided_slice %22 {offsets = [0, 256], sizes = [16, 128], strides = [1, 1]} : vector<16x384xf32> to vector<16x128xf32>
    %cst_11 = arith.constant 0.000000e+00 : f32
    %26 = vector.broadcast %cst_11 : f32 to vector<1x128xf32>
    %27 = vector.extract_strided_slice %23 {offsets = [0, 0], sizes = [15, 128], strides = [1, 1]} : vector<16x128xf32> to vector<15x128xf32>
    %28 = tpu.concatenate %26, %27 in 0 : vector<1x128xf32>, vector<15x128xf32> -> vector<16x128xf32>
    %29 = vector.extract_strided_slice %25 {offsets = [1, 0], sizes = [15, 128], strides = [1, 1]} : vector<16x128xf32> to vector<15x128xf32>
    %30 = tpu.concatenate %29, %26 in 0 : vector<15x128xf32>, vector<1x128xf32> -> vector<16x128xf32>
    %31 = arith.addf %28, %24 : vector<16x128xf32>
    %32 = arith.addf %31, %30 : vector<16x128xf32>
    %c0_12 = arith.constant 0 : index
    %c0_13 = arith.constant 0 : index
    %33 = vector.load %arg5[%c0_12, %c0_13] : memref<1x128xf32, #tpu.memory_space<vmem>>, vector<1x128xf32>
    %34 = vector.broadcast %33 : vector<1x128xf32> to vector<16x128xf32>
    %35 = arith.addf %32, %34 : vector<16x128xf32>
    %36 = arith.addf %1, %35 : vector<16x128xf32>
    %cst_14 = arith.constant 0.000000e+00 : f32
    %37 = vector.broadcast %cst_14 : f32 to vector<16x128xf32>
    %38 = arith.maximumf %36, %37 : vector<16x128xf32>
    %39 = vector.shape_cast %38 : vector<16x128xf32> to vector<1x16x128xf32>
    %c0_15 = arith.constant 0 : index
    %c0_16 = arith.constant 0 : index
    %c0_17 = arith.constant 0 : index
    %40 = vector.load %arg6[%c0_15, %c0_16, %c0_17] : memref<1x16x128xf32, #tpu.memory_space<vmem>>, vector<1x16x128xf32>
    tpu.vector_store %arg6[%c0_15, %c0_16, %c0_17], %39 {strides = array<i32>} : memref<1x16x128xf32, #tpu.memory_space<vmem>>, vector<1x16x128xf32>,
    return
  }
  func.func @transform_0(%arg0: i32) -> (i32, i32, i32) {
    %c0_i32 = arith.constant 0 : i32
    %c0_i32_0 = arith.constant 0 : i32
    %c0_i32_1 = arith.constant 0 : i32
    return %arg0, %c0_i32, %c0_i32_0 : i32, i32, i32
  }
  func.func @transform_1(%arg0: i32) -> (i32, i32) {
    %c0_i32 = arith.constant 0 : i32
    %c0_i32_0 = arith.constant 0 : i32
    %c0_i32_1 = arith.constant 0 : i32
    return %c0_i32, %c0_i32_0 : i32, i32
  }
  func.func @transform_2(%arg0: i32) -> (i32, i32) {
    %c0_i32 = arith.constant 0 : i32
    %c0_i32_0 = arith.constant 0 : i32
    %c0_i32_1 = arith.constant 0 : i32
    return %c0_i32, %c0_i32_0 : i32, i32
  }
  func.func @transform_3(%arg0: i32) -> (i32, i32) {
    %c0_i32 = arith.constant 0 : i32
    %c0_i32_0 = arith.constant 0 : i32
    %c0_i32_1 = arith.constant 0 : i32
    return %c0_i32, %c0_i32_0 : i32, i32
  }
  func.func @transform_4(%arg0: i32) -> (i32, i32) {
    %c0_i32 = arith.constant 0 : i32
    %c0_i32_0 = arith.constant 0 : i32
    %c0_i32_1 = arith.constant 0 : i32
    return %c0_i32, %c0_i32_0 : i32, i32
  }
  func.func @transform_5(%arg0: i32) -> (i32, i32, i32) {
    %c0_i32 = arith.constant 0 : i32
    %c0_i32_0 = arith.constant 0 : i32
    %c0_i32_1 = arith.constant 0 : i32
    return %arg0, %c0_i32, %c0_i32_0 : i32, i32, i32
  }
}

</mosaic_0001>

<llo_original>
// kernel: tpu_custom_call.1
$region0: #{tpu_custom_call.1}
  #allocation0 [shape = 'u32[]', space=smem, size = 0x4, offset = 0x4, fixed_abs, tag = 'smem constant byte address 0x4 - core index']
  #allocation1 [shape = 'u32[144,128]{1,0:T(1,128)}', space=vmem, size = 0x12000, scoped, tag = 'internal scratch']
  %s0 = inlined_call_operand.hbm [shape: f32[2,16,128], index: 0, kind: input, shape index: {}]
  %s1 = inlined_call_operand.hbm [shape: bf16[128,384], index: 1, kind: input, shape index: {}]
  %s2 = inlined_call_operand.vmem [shape: f32[1,128], index: 2, kind: input, shape index: {}]
  %s3 = inlined_call_operand.hbm [shape: bf16[128,384], index: 3, kind: input, shape index: {}]
  %s4 = inlined_call_operand.vmem [shape: f32[1,128], index: 4, kind: input, shape index: {}]
  %s5 = inlined_call_operand.hbm [shape: f32[2,16,128], index: 5, kind: output, shape index: {}]
  %s6 = sld [smem:[#allocation0]]
  $region65: #{tpu_custom_call.1} parent=0
    _
  %s8 = ssub.s32 1, %s6
  %s9 = scalar_select 0, %s8, %s6
  $region1: #{tpu_custom_call.1} parent=0
    #allocation2 [shape = 'u8[16384]{0}', space=vmem, size = 0x4000, scoped, tag = 'input window, operand 0']
    #allocation3 [shape = 's32[2]{0}', space=sflag, size = 0x8, scoped, tag = 'scoped memory for tpu_custom_call.1']
    #allocation4 [shape = 's32[2]{0}', space=sflag, size = 0x8, scoped, tag = 'scoped memory for tpu_custom_call.1']
    #allocation5 [shape = 'u8[98304]{0}', space=vmem, size = 0x18000, scoped, tag = 'input window, operand 1, single buffered']
    #allocation6 [shape = 's32[1]{0}', space=sflag, size = 0x4, scoped, tag = 'scoped memory for tpu_custom_call.1']
    #allocation7 [shape = 'u8[98304]{0}', space=vmem, size = 0x18000, scoped, tag = 'input window, operand 3, single buffered']
    #allocation8 [shape = 'u8[16384]{0}', space=vmem, size = 0x4000, scoped, tag = 'output window, operand 0']
    %10 = vsyncpa [#allocation3], 0
    %s11 = scalar_lea.sflag [#allocation3], 1
    %12 = vsyncpa %s11, 0
    %13 = vsyncpa [#allocation6], 0
    %14 = vsyncpa [#allocation4], 0
    %s15 = scalar_lea.sflag [#allocation4], 1
    %16 = vsyncpa %s15, 0
    loop: start=0, step=1, limit=4
    $region2: #{tpu_custom_call.1} parent=1 // loop_pre_header
      _
    $region3: #{tpu_custom_call.1} parent=1 // loop_header
      %s18 = sphi 0, %s22
      %p19 = scmp.ge.s32.totalorder %s18, 4
      %s28 = sphi 0, %s30
      %s31 = sphi 0, %s28
      %s32 = sphi 0, %s31
      %s48 = sphi 0, %s32
      %s52 = sphi 0, %s52
      %s54 = sphi 0, %s52
      %s55 = sphi 0, %s54
      %s69 = sphi 0, %s55
      %s73 = sphi 0, %s73
      %s75 = sphi 0, %s73
      %s76 = sphi 0, %s75
      %s90 = sphi 0, %s76
      %s94 = sphi 0, %s94
      %s96 = sphi 0, %s94
      %s97 = sphi 0, %s96
      %s111 = sphi 0, %s97
      %s115 = sphi 0, %s115
      %s117 = sphi 0, %s115
      %s118 = sphi 0, %s117
      %s132 = sphi 0, %s118
      %s138 = sphi 0, %s140
      %s141 = sphi 0, %s138
      %s142 = sphi 0, %s141
      %s158 = sphi 0, %s142
    $region4: #{tpu_custom_call.1} parent=1 // loop_header_branch
      %21 = sbr.rel (%p19) target = $region8
    $region5: #{tpu_custom_call.1} parent=1 // loop_body
      %s23 = ssub.s32 %s18, 1
      %s24 = ssub.s32 %s18, 2
      %s25 = sadd.s32 %s18, 1
      %s26 = ssub.s32 %s18, %s25
      %p27 = scmp.eq.s32.totalorder %s26, 0
      %s29 = sadd.s32 %s28, 1
      %s30 = scalar_select %p27, %s28, %s29
      %p33 = pneg %p27
      %p34 = scmp.eq.s32.totalorder %s18, 1
      %p35 = por %p33, %p34
      %p36 = scmp.ne.s32.totalorder %s28, %s31
      %p37 = scmp.eq.s32.totalorder %s18, 0
      %p38 = por %p36, %p37
      %p39 = scmp.ne.s32.totalorder %s28, %s31
      %p40 = scmp.eq.s32.totalorder %s23, 1
      %p41 = por %p39, %p40
      %p42 = scmp.ne.s32.totalorder %s31, %s32
      %p43 = scmp.eq.s32.totalorder %s23, 0
      %p44 = por %p42, %p43
      %p45 = scmp.ne.s32.totalorder %s31, %s32
      %p46 = scmp.eq.s32.totalorder %s24, 1
      %p47 = por %p45, %p46
      %p49 = scmp.ne.s32.totalorder %s32, %s48
      %p50 = scmp.eq.s32.totalorder %s24, 0
      %p51 = por %p49, %p50
      %s53 = sadd.s32 %s52, 1
      %p56 = scmp.eq.s32.totalorder %s18, 1
      %p57 = scmp.ne.s32.totalorder %s52, %s54
      %p58 = scmp.eq.s32.totalorder %s18, 0
      %p59 = por %p57, %p58
      %p60 = scmp.ne.s32.totalorder %s52, %s54
      %p61 = scmp.eq.s32.totalorder %s23, 1
      %p62 = por %p60, %p61
      %p63 = scmp.ne.s32.totalorder %s54, %s55
      %p64 = scmp.eq.s32.totalorder %s23, 0
      %p65 = por %p63, %p64
      %p66 = scmp.ne.s32.totalorder %s54, %s55
      %p67 = scmp.eq.s32.totalorder %s24, 1
      %p68 = por %p66, %p67
      %p70 = scmp.ne.s32.totalorder %s55, %s69
      %p71 = scmp.eq.s32.totalorder %s24, 0
      %p72 = por %p70, %p71
      %s74 = sadd.s32 %s73, 1
      %p77 = scmp.eq.s32.totalorder %s18, 1
      %p78 = scmp.ne.s32.totalorder %s73, %s75
      %p79 = scmp.eq.s32.totalorder %s18, 0
      %p80 = por %p78, %p79
      %p81 = scmp.ne.s32.totalorder %s73, %s75
      %p82 = scmp.eq.s32.totalorder %s23, 1
      %p83 = por %p81, %p82
      %p84 = scmp.ne.s32.totalorder %s75, %s76
      %p85 = scmp.eq.s32.totalorder %s23, 0
      %p86 = por %p84, %p85
      %p87 = scmp.ne.s32.totalorder %s75, %s76
      %p88 = scmp.eq.s32.totalorder %s24, 1
      %p89 = por %p87, %p88
      %p91 = scmp.ne.s32.totalorder %s76, %s90
      %p92 = scmp.eq.s32.totalorder %s24, 0
      %p93 = por %p91, %p92
      %s95 = sadd.s32 %s94, 1
      %p98 = scmp.eq.s32.totalorder %s18, 1
      %p99 = scmp.ne.s32.totalorder %s94, %s96
      %p100 = scmp.eq.s32.totalorder %s18, 0
      %p101 = por %p99, %p100
      %p102 = scmp.ne.s32.totalorder %s94, %s96
      %p103 = scmp.eq.s32.totalorder %s23, 1
      %p104 = por %p102, %p103
      %p105 = scmp.ne.s32.totalorder %s96, %s97
      %p106 = scmp.eq.s32.totalorder %s23, 0
      %p107 = por %p105, %p106
      %p108 = scmp.ne.s32.totalorder %s96, %s97
      %p109 = scmp.eq.s32.totalorder %s24, 1
      %p110 = por %p108, %p109
      %p112 = scmp.ne.s32.totalorder %s97, %s111
      %p113 = scmp.eq.s32.totalorder %s24, 0
      %p114 = por %p112, %p113
      %s116 = sadd.s32 %s115, 1
      %p119 = scmp.eq.s32.totalorder %s18, 1
      %p120 = scmp.ne.s32.totalorder %s115, %s117
      %p121 = scmp.eq.s32.totalorder %s18, 0
      %p122 = por %p120, %p121
      %p123 = scmp.ne.s32.totalorder %s115, %s117
      %p124 = scmp.eq.s32.totalorder %s23, 1
      %p125 = por %p123, %p124
      %p126 = scmp.ne.s32.totalorder %s117, %s118
      %p127 = scmp.eq.s32.totalorder %s23, 0
      %p128 = por %p126, %p127
      %p129 = scmp.ne.s32.totalorder %s117, %s118
      %p130 = scmp.eq.s32.totalorder %s24, 1
      %p131 = por %p129, %p130
      %p133 = scmp.ne.s32.totalorder %s118, %s132
      %p134 = scmp.eq.s32.totalorder %s24, 0
      %p135 = por %p133, %p134
      %s136 = ssub.s32 %s18, %s25
      %p137 = scmp.eq.s32.totalorder %s136, 0
      %s139 = sadd.s32 %s138, 1
      %s140 = scalar_select %p137, %s138, %s139
      %p143 = pneg %p137
      %p144 = scmp.eq.s32.totalorder %s18, 1
      %p145 = por %p143, %p144
      %p146 = scmp.ne.s32.totalorder %s138, %s141
      %p147 = scmp.eq.s32.totalorder %s18, 0
      %p148 = por %p146, %p147
      %p149 = scmp.ne.s32.totalorder %s138, %s141
      %p150 = scmp.eq.s32.totalorder %s23, 1
      %p151 = por %p149, %p150
      %p152 = scmp.ne.s32.totalorder %s141, %s142
      %p153 = scmp.eq.s32.totalorder %s23, 0
      %p154 = por %p152, %p153
      %p155 = scmp.ne.s32.totalorder %s141, %s142
      %p156 = scmp.eq.s32.totalorder %s24, 1
      %p157 = por %p155, %p156
      %p159 = scmp.ne.s32.totalorder %s142, %s158
      %p160 = scmp.eq.s32.totalorder %s24, 0
      %p161 = por %p159, %p160
      %p162 = scmp.le.s32.totalorder 1, %s18
      %p163 = scmp.lt.s32.totalorder %s18, 3
      %p164 = pnand %p162, %p163
      %p165 = pneg %p164
      // Predicated region
      $region9: #{tpu_custom_call.1} parent=5 // pred_check
        _
      $region10: #{tpu_custom_call.1} parent=5 // pred_check_branch
        %167 = sbr.rel (%p164) target = $region12
      $region11: #{tpu_custom_call.1} parent=5 // pred_region
        %s168 = ssub.s32 %s18, 1
        // Predicated region
        $region13: #{tpu_custom_call.1} parent=11 // pred_check
          %p169 = pneg %p65
        $region14: #{tpu_custom_call.1} parent=11 // pred_check_branch
          %171 = sbr.rel (%p169) target = $region16
        $region15: #{tpu_custom_call.1} parent=11 // pred_region
          %s173 = ssub.s32 3072, 3072
          %174 = vsyncadd [#allocation6], %s173
          %s175 = sshll.u32 [#allocation5], 4
          %s176 = int_to_ptr.vmem [resolvable:$true] %s175
          %181 = dma.hbm_to_vmem [thread:$0]  %s1, 3072, %s176, [#allocation6], 192, 192, 12
        $region16: #{tpu_custom_call.1} parent=11 // pred_fallthru
          _
        // Predicated region
        $region17: #{tpu_custom_call.1} parent=11 // pred_check
          %p182 = pneg %p86
        $region18: #{tpu_custom_call.1} parent=11 // pred_check_branch
          %184 = sbr.rel (%p182) target = $region20
        $region19: #{tpu_custom_call.1} parent=11 // pred_region
          _
        $region20: #{tpu_custom_call.1} parent=11 // pred_fallthru
          _
        // Predicated region
        $region21: #{tpu_custom_call.1} parent=11 // pred_check
          %p185 = pneg %p107
        $region22: #{tpu_custom_call.1} parent=11 // pred_check_branch
          %187 = sbr.rel (%p185) target = $region24
        $region23: #{tpu_custom_call.1} parent=11 // pred_region
          %s189 = ssub.s32 3072, 3072
          %190 = vsyncadd [#allocation6], %s189
          %s191 = sshll.u32 [#allocation7], 4
          %s192 = int_to_ptr.vmem [resolvable:$true] %s191
          %197 = dma.hbm_to_vmem [thread:$0]  %s3, 3072, %s192, [#allocation6], 192, 192, 12
        $region24: #{tpu_custom_call.1} parent=11 // pred_fallthru
          _
        // Predicated region
        $region25: #{tpu_custom_call.1} parent=11 // pred_check
          %p198 = pneg %p128
        $region26: #{tpu_custom_call.1} parent=11 // pred_check_branch
          %200 = sbr.rel (%p198) target = $region28
        $region27: #{tpu_custom_call.1} parent=11 // pred_region
          _
        $region28: #{tpu_custom_call.1} parent=11 // pred_fallthru
          _
      $region12: #{tpu_custom_call.1} parent=5 // pred_fallthru
        _
      %p201 = scmp.lt.s32.totalorder %s18, 2
      // Predicated region
      $region29: #{tpu_custom_call.1} parent=5 // pred_check
        %p202 = pneg %p201
      $region30: #{tpu_custom_call.1} parent=5 // pred_check_branch
        %204 = sbr.rel (%p202) target = $region32
      $region31: #{tpu_custom_call.1} parent=5 // pred_region
        // Predicated region
        $region33: #{tpu_custom_call.1} parent=31 // pred_check
          %p205 = pneg %p38
        $region34: #{tpu_custom_call.1} parent=31 // pred_check_branch
          %207 = sbr.rel (%p205) target = $region36
        $region35: #{tpu_custom_call.1} parent=31 // pred_region
          %s208 = sand.u32 %s28, 1
          %s209 = scalar_lea.sflag [#allocation3], %s208
          %s210 = sand.u32 %s28, 1
          %s211 = smul.addr %s210, 16
          %s212 = scalar_lea.vmem [#allocation2], %s211
          %s214 = ssub.s32 256, 256
          %215 = vsyncadd %s209, %s214
          %s216 = smul.addr %s18, 2
          %s217 = smul.addr %s216, 128
          %s218 = scalar_lea.hbm %s0, %s217
          %s219 = sshll.u32 %s212, 4
          %s220 = int_to_ptr.vmem [resolvable:$true] %s219
          %225 = dma.hbm_to_vmem [thread:$0]  %s218, 256, %s220, %s209, 128, 128, 8
        $region36: #{tpu_custom_call.1} parent=31 // pred_fallthru
          _
      $region32: #{tpu_custom_call.1} parent=5 // pred_fallthru
        _
      %p226 = scmp.le.s32.totalorder 1, %s18
      %p227 = scmp.lt.s32.totalorder %s18, 3
      %p228 = pnand %p226, %p227
      %p229 = pneg %p228
      // Predicated region
      $region37: #{tpu_custom_call.1} parent=5 // pred_check
        _
      $region38: #{tpu_custom_call.1} parent=5 // pred_check_branch
        %231 = sbr.rel (%p228) target = $region40
      $region39: #{tpu_custom_call.1} parent=5 // pred_region
        %s232 = ssub.s32 %s18, 1
        %s233 = sand.u32 %s31, 1
        %s234 = scalar_lea.sflag [#allocation3], %s233
        %s235 = sand.u32 %s31, 1
        %s236 = smul.addr %s235, 16
        %s237 = scalar_lea.vmem [#allocation2], %s236
        // Predicated region
        $region41: #{tpu_custom_call.1} parent=39 // pred_check
          %p238 = pneg %p44
        $region42: #{tpu_custom_call.1} parent=39 // pred_check_branch
          %240 = sbr.rel (%p238) target = $region44
        $region43: #{tpu_custom_call.1} parent=39 // pred_region
          %241 = dma.done %s234, 256
        $region44: #{tpu_custom_call.1} parent=39 // pred_fallthru
          _
        // Predicated region
        $region45: #{tpu_custom_call.1} parent=39 // pred_check
          %p242 = pneg %p65
        $region46: #{tpu_custom_call.1} parent=39 // pred_check_branch
          %244 = sbr.rel (%p242) target = $region48
        $region47: #{tpu_custom_call.1} parent=39 // pred_region
          %245 = dma.done [#allocation6], 3072
        $region48: #{tpu_custom_call.1} parent=39 // pred_fallthru
          _
        // Predicated region
        $region49: #{tpu_custom_call.1} parent=39 // pred_check
          %p246 = pneg %p107
        $region50: #{tpu_custom_call.1} parent=39 // pred_check_branch
          %248 = sbr.rel (%p246) target = $region52
        $region51: #{tpu_custom_call.1} parent=39 // pred_region
          %249 = dma.done [#allocation6], 3072
        $region52: #{tpu_custom_call.1} parent=39 // pred_fallthru
          _
        %s250 = sand.u32 %s31, 1
        %s251 = scalar_lea.sflag [#allocation3], %s250
        %s252 = sand.u32 %s31, 1
        %s253 = smul.addr %s252, 16
        %s254 = scalar_lea.vmem [#allocation2], %s253
        %p255 = pneg %p44
        %p256 = pneg %p41
        %p257 = pneg %p65
        %p258 = pneg %p62
        %p259 = pneg %p86
        %p260 = pneg %p83
        %p261 = pneg %p107
        %p262 = pneg %p104
        %p263 = pneg %p128
        %p264 = pneg %p125
        %p265 = pneg %p154
        %p266 = pneg %p151
        %s267 = sand.u32 %s141, 1
        %s268 = scalar_lea.sflag [#allocation4], %s267
        %s269 = sand.u32 %s141, 1
        %s270 = smul.addr %s269, 16
        %s271 = scalar_lea.vmem [#allocation8], %s270
        %v273 = vld [vmem:[%s237] sm:$0xff]
        %v274 = vld [vmem:[%s237 + $0x8] sm:$0xff]
        %v275 = vpack.c.bf16 %v274, %v273
        %v276 = vld [vmem:[#allocation5] sm:$0xff]
        %v277 = vld [vmem:[#allocation5 + $0x8] sm:$0xf]
        %v278 = vld [vmem:[#allocation5 + $0xc] sm:$0xff]
        %v279 = vld [vmem:[#allocation5 + $0x14] sm:$0xf]
        %v280 = vld [vmem:[#allocation5 + $0x18] sm:$0xff]
        %v281 = vld [vmem:[#allocation5 + $0x20] sm:$0xf]
        %v282 = vld [vmem:[#allocation5 + $0x24] sm:$0xff]
        %v283 = vld [vmem:[#allocation5 + $0x2c] sm:$0xf]
        %v284 = vld [vmem:[#allocation5 + $0x30] sm:$0xff]
        %v285 = vld [vmem:[#allocation5 + $0x38] sm:$0xf]
        %v286 = vld [vmem:[#allocation5 + $0x3c] sm:$0xff]
        %v287 = vld [vmem:[#allocation5 + $0x44] sm:$0xf]
        %v288 = vld [vmem:[#allocation5 + $0x48] sm:$0xff]
        %v289 = vld [vmem:[#allocation5 + $0x50] sm:$0xf]
        %v290 = vld [vmem:[#allocation5 + $0x54] sm:$0xff]
        %v291 = vld [vmem:[#allocation5 + $0x5c] sm:$0xf]
        %v292 = vld [vmem:[#allocation5 + $0x60] sm:$0xff]
        %v293 = vld [vmem:[#allocation5 + $0x68] sm:$0xf]
        %v294 = vld [vmem:[#allocation5 + $0x6c] sm:$0xff]
        %v295 = vld [vmem:[#allocation5 + $0x74] sm:$0xf]
        %v296 = vld [vmem:[#allocation5 + $0x78] sm:$0xff]
        %v297 = vld [vmem:[#allocation5 + $0x80] sm:$0xf]
        %v298 = vld [vmem:[#allocation5 + $0x84] sm:$0xff]
        %v299 = vld [vmem:[#allocation5 + $0x8c] sm:$0xf]
        %v300 = vld [vmem:[#allocation5 + $0x90] sm:$0xff]
        %v301 = vld [vmem:[#allocation5 + $0x98] sm:$0xf]
        %v302 = vld [vmem:[#allocation5 + $0x9c] sm:$0xff]
        %v303 = vld [vmem:[#allocation5 + $0xa4] sm:$0xf]
        %v304 = vld [vmem:[#allocation5 + $0xa8] sm:$0xff]
        %v305 = vld [vmem:[#allocation5 + $0xb0] sm:$0xf]
        %v306 = vld [vmem:[#allocation5 + $0xb4] sm:$0xff]
        %v307 = vld [vmem:[#allocation5 + $0xbc] sm:$0xf]
        %v340 = vunpack.c.l.b16 %v276
        %v341 = vunpack.c.h.b16 %v276
        %v342 = vunpack.c.l.b16 %v277
        %v343 = vunpack.c.l.b16 %v278
        %v344 = vunpack.c.h.b16 %v278
        %v345 = vunpack.c.l.b16 %v279
        %v346 = vunpack.c.l.b16 %v280
        %v347 = vunpack.c.h.b16 %v280
        %v348 = vunpack.c.l.b16 %v281
        %v349 = vunpack.c.l.b16 %v282
        %v350 = vunpack.c.h.b16 %v282
        %v351 = vunpack.c.l.b16 %v283
        %v352 = vunpack.c.l.b16 %v284
        %v353 = vunpack.c.h.b16 %v284
        %v354 = vunpack.c.l.b16 %v285
        %v355 = vunpack.c.l.b16 %v286
        %v356 = vunpack.c.h.b16 %v286
        %v357 = vunpack.c.l.b16 %v287
        %v358 = vunpack.c.l.b16 %v288
        %v359 = vunpack.c.h.b16 %v288
        %v360 = vunpack.c.l.b16 %v289
        %v361 = vunpack.c.l.b16 %v290
        %v362 = vunpack.c.h.b16 %v290
        %v363 = vunpack.c.l.b16 %v291
        %v364 = vunpack.c.l.b16 %v292
        %v365 = vunpack.c.h.b16 %v292
        %v366 = vunpack.c.l.b16 %v293
        %v367 = vunpack.c.l.b16 %v294
        %v368 = vunpack.c.h.b16 %v294
        %v369 = vunpack.c.l.b16 %v295
        %v370 = vunpack.c.l.b16 %v296
        %v371 = vunpack.c.h.b16 %v296
        %v372 = vunpack.c.l.b16 %v297
        %v373 = vunpack.c.l.b16 %v298
        %v374 = vunpack.c.h.b16 %v298
        %v375 = vunpack.c.l.b16 %v299
        %v376 = vunpack.c.l.b16 %v300
        %v377 = vunpack.c.h.b16 %v300
        %v378 = vunpack.c.l.b16 %v301
        %v379 = vunpack.c.l.b16 %v302
        %v380 = vunpack.c.h.b16 %v302
        %v381 = vunpack.c.l.b16 %v303
        %v382 = vunpack.c.l.b16 %v304
        %v383 = vunpack.c.h.b16 %v304
        %v384 = vunpack.c.l.b16 %v305
        %v385 = vunpack.c.l.b16 %v306
        %v386 = vunpack.c.h.b16 %v306
        %v387 = vunpack.c.l.b16 %v307
        %v388 = vpack.c.b16 %v343, %v340
        %v389 = vpack.c.b16 %v344, %v341
        %v390 = vpack.c.b16 %v345, %v342
        %v391 = vpack.c.b16 %v349, %v346
        %v392 = vpack.c.b16 %v350, %v347
        %v393 = vpack.c.b16 %v351, %v348
        %v394 = vpack.c.b16 %v355, %v352
        %v395 = vpack.c.b16 %v356, %v353
        %v396 = vpack.c.b16 %v357, %v354
        %v397 = vpack.c.b16 %v361, %v358
        %v398 = vpack.c.b16 %v362, %v359
        %v399 = vpack.c.b16 %v363, %v360
        %v400 = vpack.c.b16 %v367, %v364
        %v401 = vpack.c.b16 %v368, %v365
        %v402 = vpack.c.b16 %v369, %v366
        %v403 = vpack.c.b16 %v373, %v370
        %v404 = vpack.c.b16 %v374, %v371
        %v405 = vpack.c.b16 %v375, %v372
        %v406 = vpack.c.b16 %v379, %v376
        %v407 = vpack.c.b16 %v380, %v377
        %v408 = vpack.c.b16 %v381, %v378
        %v409 = vpack.c.b16 %v385, %v382
        %v410 = vpack.c.b16 %v386, %v383
        %v411 = vpack.c.b16 %v387, %v384
        %436 = vmatprep.subr.bf16.mxu0 %v410
        %437 = vmatpush1.bf16.msra.mxu0 %v409
        %438 = vmatprep.subr.bf16.mxu0 %v407
        %439 = vmatpush1.bf16.msra.mxu0 %v406
        %440 = vmatprep.subr.bf16.mxu0 %v404
        %441 = vmatpush1.bf16.msra.mxu0 %v403
        %442 = vmatprep.subr.bf16.mxu0 %v401
        %443 = vmatpush1.bf16.msra.mxu0 %v400
        %444 = vmatprep.subr.bf16.mxu0 %v398
        %445 = vmatpush1.bf16.msra.mxu0 %v397
        %446 = vmatprep.subr.bf16.mxu0 %v395
        %447 = vmatpush1.bf16.msra.mxu0 %v394
        %448 = vmatprep.subr.bf16.mxu0 %v392
        %449 = vmatpush1.bf16.msra.mxu0 %v391
        %450 = vmatprep.subr.bf16.mxu0 %v389
        %451 = vmatpush1.bf16.msra.mxu0 %v388
        %452 = vmatprep.subr.bf16.mxu0 0
        %453 = vmatpush2.bf16.msra.mxu0 0
        %454 = vmatprep.subr.bf16.mxu0 0
        %455 = vmatpush2.bf16.msra.mxu0 0
        %456 = vmatprep.subr.bf16.mxu0 0
        %457 = vmatpush2.bf16.msra.mxu0 0
        %458 = vmatprep.subr.bf16.mxu0 0
        %459 = vmatpush2.bf16.msra.mxu0 0
        %460 = vmatprep.subr.bf16.mxu0 0
        %461 = vmatpush2.bf16.msra.mxu0 0
        %462 = vmatprep.subr.bf16.mxu0 0
        %463 = vmatpush2.bf16.msra.mxu0 0
        %464 = vmatprep.subr.bf16.mxu0 0
        %465 = vmatpush2.bf16.msra.mxu0 0
        %466 = vmatprep.subr.bf16.mxu0 0
        %467 = vmatpush2.bf16.msra.mxu0 0
        %468 = vmatprep.mubr.bf16.mxu0 0
        %469 = vmatmul.mubr.bf16.gmra.mxu0 %v275
        %v470 = vpop.f32.mrf.mxu0
        %v471 = vadd.f32 0.0, %v470
        %v472 = vpop.f32.mrf.mxu0
        %v473 = vadd.f32 0.0, %v472
        %v474 = vpop.f32.mrf.mxu0
        %v475 = vadd.f32 0.0, %v474
        %v476 = vpop.f32.mrf.mxu0
        %v477 = vadd.f32 0.0, %v476
        %478 = vdwg.mxu0
        %479 = vmatprep.subr.bf16.mxu0 0
        %480 = vmatpush1.bf16.msra.mxu0 %v411
        %481 = vmatprep.subr.bf16.mxu0 0
        %482 = vmatpush1.bf16.msra.mxu0 %v408
        %483 = vmatprep.subr.bf16.mxu0 0
        %484 = vmatpush1.bf16.msra.mxu0 %v405
        %485 = vmatprep.subr.bf16.mxu0 0
        %486 = vmatpush1.bf16.msra.mxu0 %v402
        %487 = vmatprep.subr.bf16.mxu0 0
        %488 = vmatpush1.bf16.msra.mxu0 %v399
        %489 = vmatprep.subr.bf16.mxu0 0
        %490 = vmatpush1.bf16.msra.mxu0 %v396
        %491 = vmatprep.subr.bf16.mxu0 0
        %492 = vmatpush1.bf16.msra.mxu0 %v393
        %493 = vmatprep.subr.bf16.mxu0 0
        %494 = vmatpush1.bf16.msra.mxu0 %v390
        %495 = vmatprep.subr.bf16.mxu0 0
        %496 = vmatpush2.bf16.msra.mxu0 0
        %497 = vmatprep.subr.bf16.mxu0 0
        %498 = vmatpush2.bf16.msra.mxu0 0
        %499 = vmatprep.subr.bf16.mxu0 0
        %500 = vmatpush2.bf16.msra.mxu0 0
        %501 = vmatprep.subr.bf16.mxu0 0
        %502 = vmatpush2.bf16.msra.mxu0 0
        %503 = vmatprep.subr.bf16.mxu0 0
        %504 = vmatpush2.bf16.msra.mxu0 0
        %505 = vmatprep.subr.bf16.mxu0 0
        %506 = vmatpush2.bf16.msra.mxu0 0
        %507 = vmatprep.subr.bf16.mxu0 0
        %508 = vmatpush2.bf16.msra.mxu0 0
        %509 = vmatprep.subr.bf16.mxu0 0
        %510 = vmatpush2.bf16.msra.mxu0 0
        %511 = vmatprep.mubr.bf16.mxu0 0
        %512 = vmatmul.mubr.bf16.gmra.mxu0 %v275
        %v513 = vpop.f32.mrf.mxu0
        %v514 = vadd.f32 0.0, %v513
        %v515 = vpop.f32.mrf.mxu0
        %v516 = vpop.f32.mrf.mxu0
        %v517 = vadd.f32 0.0, %v516
        %v518 = vpop.f32.mrf.mxu0
        %519 = vdwg.mxu0
        %vm522 = vcmask 1040384
        %v523 = vrot.slane %v471, 7
        %v524 = vrot.slane %v475, 7
        %v525 = vsel %vm522, %v523, %v524
        %v528 = vsel %vm522, 0.0, %v523
        %vm531 = vcmask 1046528
        %v532 = vrot.slane %v514, 1
        %v533 = vrot.slane %v517, 1
        %v534 = vsel %vm531, %v532, %v533
        %v537 = vsel %vm531, %v533, 0.0
        %v538 = vadd.f32 %v528, %v473
        %v539 = vadd.f32 %v525, %v477
        %v540 = vadd.f32 %v538, %v534
        %v541 = vadd.f32 %v539, %v537
        %v542 = vld [vmem:[%s2] sm:$0x1]
        %v544 = vlaneseq
        %v545 = vshrl.u32 %v544, 7
        %v546 = vsub.s32 0, %v545
        %v547 = vrot.slane %v542, %v546
        %v549 = vadd.f32 %v540, %v547
        %v550 = vadd.f32 %v541, %v547
        %v551 = vmax.f32 %v549, 0.0
        %v552 = vmax.f32 %v550, 0.0
        %v553 = vpack.c.bf16 %v552, %v551
        %v554 = vld [vmem:[#allocation7] sm:$0xff]
        %v555 = vld [vmem:[#allocation7 + $0x8] sm:$0xf]
        %v556 = vld [vmem:[#allocation7 + $0xc] sm:$0xff]
        %v557 = vld [vmem:[#allocation7 + $0x14] sm:$0xf]
        %v558 = vld [vmem:[#allocation7 + $0x18] sm:$0xff]
        %v559 = vld [vmem:[#allocation7 + $0x20] sm:$0xf]
        %v560 = vld [vmem:[#allocation7 + $0x24] sm:$0xff]
        %v561 = vld [vmem:[#allocation7 + $0x2c] sm:$0xf]
        %v562 = vld [vmem:[#allocation7 + $0x30] sm:$0xff]
        %v563 = vld [vmem:[#allocation7 + $0x38] sm:$0xf]
        %v564 = vld [vmem:[#allocation7 + $0x3c] sm:$0xff]
        %v565 = vld [vmem:[#allocation7 + $0x44] sm:$0xf]
        %v566 = vld [vmem:[#allocation7 + $0x48] sm:$0xff]
        %v567 = vld [vmem:[#allocation7 + $0x50] sm:$0xf]
        %v568 = vld [vmem:[#allocation7 + $0x54] sm:$0xff]
        %v569 = vld [vmem:[#allocation7 + $0x5c] sm:$0xf]
        %v570 = vld [vmem:[#allocation7 + $0x60] sm:$0xff]
        %v571 = vld [vmem:[#allocation7 + $0x68] sm:$0xf]
        %v572 = vld [vmem:[#allocation7 + $0x6c] sm:$0xff]
        %v573 = vld [vmem:[#allocation7 + $0x74] sm:$0xf]
        %v574 = vld [vmem:[#allocation7 + $0x78] sm:$0xff]
        %v575 = vld [vmem:[#allocation7 + $0x80] sm:$0xf]
        %v576 = vld [vmem:[#allocation7 + $0x84] sm:$0xff]
        %v577 = vld [vmem:[#allocation7 + $0x8c] sm:$0xf]
        %v578 = vld [vmem:[#allocation7 + $0x90] sm:$0xff]
        %v579 = vld [vmem:[#allocation7 + $0x98] sm:$0xf]
        %v580 = vld [vmem:[#allocation7 + $0x9c] sm:$0xff]
        %v581 = vld [vmem:[#allocation7 + $0xa4] sm:$0xf]
        %v582 = vld [vmem:[#allocation7 + $0xa8] sm:$0xff]
        %v583 = vld [vmem:[#allocation7 + $0xb0] sm:$0xf]
        %v584 = vld [vmem:[#allocation7 + $0xb4] sm:$0xff]
        %v585 = vld [vmem:[#allocation7 + $0xbc] sm:$0xf]
        %v618 = vunpack.c.l.b16 %v554
        %v619 = vunpack.c.h.b16 %v554
        %v620 = vunpack.c.l.b16 %v555
        %v621 = vunpack.c.l.b16 %v556
        %v622 = vunpack.c.h.b16 %v556
        %v623 = vunpack.c.l.b16 %v557
        %v624 = vunpack.c.l.b16 %v558
        %v625 = vunpack.c.h.b16 %v558
        %v626 = vunpack.c.l.b16 %v559
        %v627 = vunpack.c.l.b16 %v560
        %v628 = vunpack.c.h.b16 %v560
        %v629 = vunpack.c.l.b16 %v561
        %v630 = vunpack.c.l.b16 %v562
        %v631 = vunpack.c.h.b16 %v562
        %v632 = vunpack.c.l.b16 %v563
        %v633 = vunpack.c.l.b16 %v564
        %v634 = vunpack.c.h.b16 %v564
        %v635 = vunpack.c.l.b16 %v565
        %v636 = vunpack.c.l.b16 %v566
        %v637 = vunpack.c.h.b16 %v566
        %v638 = vunpack.c.l.b16 %v567
        %v639 = vunpack.c.l.b16 %v568
        %v640 = vunpack.c.h.b16 %v568
        %v641 = vunpack.c.l.b16 %v569
        %v642 = vunpack.c.l.b16 %v570
        %v643 = vunpack.c.h.b16 %v570
        %v644 = vunpack.c.l.b16 %v571
        %v645 = vunpack.c.l.b16 %v572
        %v646 = vunpack.c.h.b16 %v572
        %v647 = vunpack.c.l.b16 %v573
        %v648 = vunpack.c.l.b16 %v574
        %v649 = vunpack.c.h.b16 %v574
        %v650 = vunpack.c.l.b16 %v575
        %v651 = vunpack.c.l.b16 %v576
        %v652 = vunpack.c.h.b16 %v576
        %v653 = vunpack.c.l.b16 %v577
        %v654 = vunpack.c.l.b16 %v578
        %v655 = vunpack.c.h.b16 %v578
        %v656 = vunpack.c.l.b16 %v579
        %v657 = vunpack.c.l.b16 %v580
        %v658 = vunpack.c.h.b16 %v580
        %v659 = vunpack.c.l.b16 %v581
        %v660 = vunpack.c.l.b16 %v582
        %v661 = vunpack.c.h.b16 %v582
        %v662 = vunpack.c.l.b16 %v583
        %v663 = vunpack.c.l.b16 %v584
        %v664 = vunpack.c.h.b16 %v584
        %v665 = vunpack.c.l.b16 %v585
        %v666 = vpack.c.b16 %v621, %v618
        %v667 = vpack.c.b16 %v622, %v619
        %v668 = vpack.c.b16 %v623, %v620
        %v669 = vpack.c.b16 %v627, %v624
        %v670 = vpack.c.b16 %v628, %v625
        %v671 = vpack.c.b16 %v629, %v626
        %v672 = vpack.c.b16 %v633, %v630
        %v673 = vpack.c.b16 %v634, %v631
        %v674 = vpack.c.b16 %v635, %v632
        %v675 = vpack.c.b16 %v639, %v636
        %v676 = vpack.c.b16 %v640, %v637
        %v677 = vpack.c.b16 %v641, %v638
        %v678 = vpack.c.b16 %v645, %v642
        %v679 = vpack.c.b16 %v646, %v643
        %v680 = vpack.c.b16 %v647, %v644
        %v681 = vpack.c.b16 %v651, %v648
        %v682 = vpack.c.b16 %v652, %v649
        %v683 = vpack.c.b16 %v653, %v650
        %v684 = vpack.c.b16 %v657, %v654
        %v685 = vpack.c.b16 %v658, %v655
        %v686 = vpack.c.b16 %v659, %v656
        %v687 = vpack.c.b16 %v663, %v660
        %v688 = vpack.c.b16 %v664, %v661
        %v689 = vpack.c.b16 %v665, %v662
        %714 = vmatprep.subr.bf16.mxu0 %v688
        %715 = vmatpush1.bf16.msra.mxu0 %v687
        %716 = vmatprep.subr.bf16.mxu0 %v685
        %717 = vmatpush1.bf16.msra.mxu0 %v684
        %718 = vmatprep.subr.bf16.mxu0 %v682
        %719 = vmatpush1.bf16.msra.mxu0 %v681
        %720 = vmatprep.subr.bf16.mxu0 %v679
        %721 = vmatpush1.bf16.msra.mxu0 %v678
        %722 = vmatprep.subr.bf16.mxu0 %v676
        %723 = vmatpush1.bf16.msra.mxu0 %v675
        %724 = vmatprep.subr.bf16.mxu0 %v673
        %725 = vmatpush1.bf16.msra.mxu0 %v672
        %726 = vmatprep.subr.bf16.mxu0 %v670
        %727 = vmatpush1.bf16.msra.mxu0 %v669
        %728 = vmatprep.subr.bf16.mxu0 %v667
        %729 = vmatpush1.bf16.msra.mxu0 %v666
        %730 = vmatprep.subr.bf16.mxu0 0
        %731 = vmatpush2.bf16.msra.mxu0 0
        %732 = vmatprep.subr.bf16.mxu0 0
        %733 = vmatpush2.bf16.msra.mxu0 0
        %734 = vmatprep.subr.bf16.mxu0 0
        %735 = vmatpush2.bf16.msra.mxu0 0
        %736 = vmatprep.subr.bf16.mxu0 0
        %737 = vmatpush2.bf16.msra.mxu0 0
        %738 = vmatprep.subr.bf16.mxu0 0
        %739 = vmatpush2.bf16.msra.mxu0 0
        %740 = vmatprep.subr.bf16.mxu0 0
        %741 = vmatpush2.bf16.msra.mxu0 0
        %742 = vmatprep.subr.bf16.mxu0 0
        %743 = vmatpush2.bf16.msra.mxu0 0
        %744 = vmatprep.subr.bf16.mxu0 0
        %745 = vmatpush2.bf16.msra.mxu0 0
        %746 = vmatprep.mubr.bf16.mxu0 0
        %747 = vmatmul.mubr.bf16.gmra.mxu0 %v553
        %v748 = vpop.f32.mrf.mxu0
        %v749 = vadd.f32 0.0, %v748
        %v750 = vpop.f32.mrf.mxu0
        %v751 = vadd.f32 0.0, %v750
        %v752 = vpop.f32.mrf.mxu0
        %v753 = vadd.f32 0.0, %v752
        %v754 = vpop.f32.mrf.mxu0
        %v755 = vadd.f32 0.0, %v754
        %756 = vdwg.mxu0
        %757 = vmatprep.subr.bf16.mxu0 0
        %758 = vmatpush1.bf16.msra.mxu0 %v689
        %759 = vmatprep.subr.bf16.mxu0 0
        %760 = vmatpush1.bf16.msra.mxu0 %v686
        %761 = vmatprep.subr.bf16.mxu0 0
        %762 = vmatpush1.bf16.msra.mxu0 %v683
        %763 = vmatprep.subr.bf16.mxu0 0
        %764 = vmatpush1.bf16.msra.mxu0 %v680
        %765 = vmatprep.subr.bf16.mxu0 0
        %766 = vmatpush1.bf16.msra.mxu0 %v677
        %767 = vmatprep.subr.bf16.mxu0 0
        %768 = vmatpush1.bf16.msra.mxu0 %v674
        %769 = vmatprep.subr.bf16.mxu0 0
        %770 = vmatpush1.bf16.msra.mxu0 %v671
        %771 = vmatprep.subr.bf16.mxu0 0
        %772 = vmatpush1.bf16.msra.mxu0 %v668
        %773 = vmatprep.subr.bf16.mxu0 0
        %774 = vmatpush2.bf16.msra.mxu0 0
        %775 = vmatprep.subr.bf16.mxu0 0
        %776 = vmatpush2.bf16.msra.mxu0 0
        %777 = vmatprep.subr.bf16.mxu0 0
        %778 = vmatpush2.bf16.msra.mxu0 0
        %779 = vmatprep.subr.bf16.mxu0 0
        %780 = vmatpush2.bf16.msra.mxu0 0
        %781 = vmatprep.subr.bf16.mxu0 0
        %782 = vmatpush2.bf16.msra.mxu0 0
        %783 = vmatprep.subr.bf16.mxu0 0
        %784 = vmatpush2.bf16.msra.mxu0 0
        %785 = vmatprep.subr.bf16.mxu0 0
        %786 = vmatpush2.bf16.msra.mxu0 0
        %787 = vmatprep.subr.bf16.mxu0 0
        %788 = vmatpush2.bf16.msra.mxu0 0
        %789 = vmatprep.mubr.bf16.mxu0 0
        %790 = vmatmul.mubr.bf16.gmra.mxu0 %v553
        %v791 = vpop.f32.mrf.mxu0
        %v792 = vadd.f32 0.0, %v791
        %v793 = vpop.f32.mrf.mxu0
        %v794 = vpop.f32.mrf.mxu0
        %v795 = vadd.f32 0.0, %v794
        %v796 = vpop.f32.mrf.mxu0
        %797 = vdwg.mxu0
        %v800 = vrot.slane %v749, 7
        %v801 = vrot.slane %v753, 7
        %v802 = vsel %vm522, %v800, %v801
        %v805 = vsel %vm522, 0.0, %v800
        %v808 = vrot.slane %v792, 1
        %v809 = vrot.slane %v795, 1
        %v810 = vsel %vm531, %v808, %v809
        %v813 = vsel %vm531, %v809, 0.0
        %v814 = vadd.f32 %v805, %v751
        %v815 = vadd.f32 %v802, %v755
        %v816 = vadd.f32 %v814, %v810
        %v817 = vadd.f32 %v815, %v813
        %v818 = vld [vmem:[%s4] sm:$0x1]
        %v820 = vlaneseq
        %v821 = vshrl.u32 %v820, 7
        %v822 = vsub.s32 0, %v821
        %v823 = vrot.slane %v818, %v822
        %v825 = vadd.f32 %v816, %v823
        %v826 = vadd.f32 %v817, %v823
        %v827 = vadd.f32 %v273, %v825
        %v828 = vadd.f32 %v274, %v826
        %v829 = vmax.f32 %v827, 0.0
        %v830 = vmax.f32 %v828, 0.0
        %831 = vst [vmem:[%s271] sm:$0xff] %v829
        %832 = vst [vmem:[%s271 + $0x8] sm:$0xff] %v830
        %s833 = sand.u32 %s141, 1
        %s834 = scalar_lea.sflag [#allocation4], %s833
        %s835 = sand.u32 %s141, 1
        %s836 = smul.addr %s835, 16
        %s837 = scalar_lea.vmem [#allocation8], %s836
        // Predicated region
        $region53: #{tpu_custom_call.1} parent=39 // pred_check
          %p838 = pneg %p151
        $region54: #{tpu_custom_call.1} parent=39 // pred_check_branch
          %840 = sbr.rel (%p838) target = $region56
        $region55: #{tpu_custom_call.1} parent=39 // pred_region
          %s842 = ssub.s32 256, 256
          %843 = vsyncadd %s834, %s842
          %s844 = smul.addr %s23, 2
          %s845 = smul.addr %s844, 128
          %s846 = scalar_lea.hbm %s5, %s845
          %s847 = sshll.u32 %s837, 4
          %s848 = int_to_ptr.vmem [resolvable:$true] %s847
          %853 = dma.vmem_to_hbm [thread:$0]  %s848, 256, %s846, %s834, 128, 128, 8
        $region56: #{tpu_custom_call.1} parent=39 // pred_fallthru
          _
      $region40: #{tpu_custom_call.1} parent=5 // pred_fallthru
        _
      %p854 = scmp.le.s32.totalorder 2, %s18
      // Predicated region
      $region57: #{tpu_custom_call.1} parent=5 // pred_check
        %p855 = pneg %p854
      $region58: #{tpu_custom_call.1} parent=5 // pred_check_branch
        %857 = sbr.rel (%p855) target = $region60
      $region59: #{tpu_custom_call.1} parent=5 // pred_region
        %s858 = ssub.s32 %s18, 2
        // Predicated region
        $region61: #{tpu_custom_call.1} parent=59 // pred_check
          %p859 = pneg %p157
        $region62: #{tpu_custom_call.1} parent=59 // pred_check_branch
          %861 = sbr.rel (%p859) target = $region64
        $region63: #{tpu_custom_call.1} parent=59 // pred_region
          %s862 = sand.u32 %s142, 1
          %s863 = scalar_lea.sflag [#allocation4], %s862
          %s864 = sand.u32 %s142, 1
          %s865 = smul.addr %s864, 16
          %s866 = scalar_lea.vmem [#allocation8], %s865
          %867 = dma.done %s863, 256
        $region64: #{tpu_custom_call.1} parent=59 // pred_fallthru
          _
      $region60: #{tpu_custom_call.1} parent=5 // pred_fallthru
        _
    $region6: #{tpu_custom_call.1} parent=1 // loop_footer
      %s22 = sadd.s32 1, %s18
    $region7: #{tpu_custom_call.1} parent=1 // loop_footer_branch
      %17 = sbr.rel target = $region3
    $region8: #{tpu_custom_call.1} parent=1 // loop_exit
      _
    %868 = vsyncpa [#allocation3], 1
    %s869 = scalar_lea.sflag [#allocation3], 1
    %870 = vsyncpa %s869, 1
    %871 = vsyncpa [#allocation6], 1
    %872 = vsyncpa [#allocation4], 1
    %s873 = scalar_lea.sflag [#allocation4], 1
    %874 = vsyncpa %s873, 1

</llo_original>
